<compile_context>
chip_gen: v6e
topology: v6e:2x2x1
jax: 0.10.0
libtpu: 0.0.40
codegen_flags: <defaults>
</compile_context>

<pallas_src>
import functools
import numpy as np
import jax
import jax.numpy as jnp
from jax.experimental import pallas as pl
from jax.experimental.pallas import tpu as pltpu

LANE = 128
MAX_SINGLE_K = 8192                  # full-K single-shot threshold (padded K)
TILE_VMEM_BUDGET = 24 * 1024 * 1024  # double-buffered tile-set budget
VMEM_LIMIT = 32 * 1024 * 1024        # explicit scoped-VMEM limit (ok on v5e/v6e/v7x)


def _rup(x, m):
    return ((x + m - 1) // m) * m


@functools.lru_cache(maxsize=1)
def _is_v5e():
    try:
        kind = jax.devices()[0].device_kind.lower()
        return ("v5 lite" in kind) or ("v5e" in kind) or ("v5litepod" in kind)
    except Exception:
        return False


# ---------------------------------------------------------------------------
# Pallas kernels
# ---------------------------------------------------------------------------

def _mm_kernel_single(a_ref, b_ref, bias_ref, o_ref):
    """One full-K MXU pass; bias + ReLU fused; bf16 store."""
    acc = jnp.dot(a_ref[...], b_ref[...], preferred_element_type=jnp.float32)
    o_ref[...] = jnp.maximum(acc + bias_ref[...], 0.0).astype(o_ref.dtype)


def _mm_kernel_multik(a_ref, b_ref, bias_ref, o_ref, acc_ref):
    """K-tiled fallback: accumulate in f32 VMEM scratch, bf16 store at the end."""
    @pl.when(pl.program_id(2) == 0)
    def _():
        acc_ref[...] = jnp.zeros_like(acc_ref)

    acc_ref[...] += jnp.dot(a_ref[...], b_ref[...],
                            preferred_element_type=jnp.float32)

    @pl.when(pl.program_id(2) == pl.num_programs(2) - 1)
    def _():
        o_ref[...] = jnp.maximum(acc_ref[...] + bias_ref[...],
                                 0.0).astype(o_ref.dtype)


def _tile_bytes(tm, tn, tk, multik):
    """Conservative double-buffered VMEM estimate for one tile set (bf16 A/B/out)."""
    b = 2 * (tm * tk * 2) + 2 * (tk * tn * 2) + 2 * (tm * tn * 2) + 2 * (tn * 4)
    if multik:
        b += tm * tn * 4
    return b


def _matmul_bias_relu(a_p, b_p, bias_p, TM):
    """(Mp,Kp)bf16 @ (Kp,Np)bf16 -> (Mp,Np)bf16, + per-column f32 bias, + ReLU."""
    Mp, Kp = a_p.shape
    _, Np = b_p.shape
    ni = Mp // TM

    cost = pl.CostEstimate(
        flops=2 * Mp * Kp * Np,
        transcendentals=0,
        bytes_accessed=Mp * Kp * 2 + Kp * Np * 2 + Mp * Np * 2)

    def cparams(sem):
        return pltpu.CompilerParams(dimension_semantics=sem,
                                    vmem_limit_bytes=VMEM_LIMIT)

    out_shape = jax.ShapeDtypeStruct((Mp, Np), jnp.bfloat16)

    # --- Path 1: full-K, full-N weight resident in VMEM; grid over M only. ---
    if Kp <= MAX_SINGLE_K and ni >= 2:
        for tm in ((TM, 128) if TM > 128 else (TM,)):
            if Mp % tm:
                continue
            if _tile_bytes(tm, Np, Kp, False) > TILE_VMEM_BUDGET:
                continue
            return pl.pallas_call(
                _mm_kernel_single,
                out_shape=out_shape,
                grid_spec=pltpu.PrefetchScalarGridSpec(
                    num_scalar_prefetch=0,
                    grid=(Mp // tm,),
                    in_specs=[
                        pl.BlockSpec((tm, Kp), lambda i: (i, 0)),
                        pl.BlockSpec((Kp, Np), lambda i: (0, 0)),   # weight: index never changes
                        pl.BlockSpec((1, Np), lambda i: (0, 0)),
                    ],
                    out_specs=pl.BlockSpec((tm, Np), lambda i: (i, 0)),
                ),
                compiler_params=cparams(("parallel",)),
                cost_estimate=cost,
            )(a_p, b_p, bias_p)

    # --- Path 2: full-K, N tiled; grid order chosen to minimize HBM re-fetch. ---
    if Kp <= MAX_SINGLE_K:
        TN = 256 if (Np % 256 == 0 and not _is_v5e()) else 128
        tm = TM
        while (_tile_bytes(tm, TN, Kp, False) > TILE_VMEM_BUDGET
               and tm > 128 and Mp % (tm // 2) == 0):
            tm //= 2
        while _tile_bytes(tm, TN, Kp, False) > TILE_VMEM_BUDGET and TN > 128:
            TN //= 2
        ni2, nj = Mp // tm, Np // TN
        extra_b = (ni2 - 1) * Kp * Np    # weight re-fetch bytes if i is outer
        extra_a = (nj - 1) * Mp * Kp     # activation re-fetch bytes if j is outer
        if extra_b <= extra_a:           # i outer / j inner: activations stream once
            grid = (ni2, nj)
            a_spec = pl.BlockSpec((tm, Kp), lambda i, j: (i, 0))
            b_spec = pl.BlockSpec((Kp, TN), lambda i, j: (0, j))
            s_spec = pl.BlockSpec((1, TN), lambda i, j: (0, j))
            o_spec = pl.BlockSpec((tm, TN), lambda i, j: (i, j))
        else:                            # j outer / i inner: weights stream once
            grid = (nj, ni2)
            a_spec = pl.BlockSpec((tm, Kp), lambda j, i: (i, 0))
            b_spec = pl.BlockSpec((Kp, TN), lambda j, i: (0, j))
            s_spec = pl.BlockSpec((1, TN), lambda j, i: (0, j))
            o_spec = pl.BlockSpec((tm, TN), lambda j, i: (i, j))
        return pl.pallas_call(
            _mm_kernel_single,
            out_shape=out_shape,
            grid_spec=pltpu.PrefetchScalarGridSpec(
                num_scalar_prefetch=0,
                grid=grid,
                in_specs=[a_spec, b_spec, s_spec],
                out_specs=o_spec,
            ),
            compiler_params=cparams(("parallel", "parallel")),
            cost_estimate=cost,
        )(a_p, b_p, bias_p)

    # --- Path 3: very large K: K-tiled, f32 VMEM accumulator, reduction last. ---
    TN = 256 if (Np % 256 == 0 and not _is_v5e()) else 128
    TK = next(t for t in (4096, 2048, 1024, 512, 256, 128) if Kp % t == 0)
    return pl.pallas_call(
        _mm_kernel_multik,
        out_shape=out_shape,
        grid_spec=pltpu.PrefetchScalarGridSpec(
            num_scalar_prefetch=0,
            grid=(Mp // TM, Np // TN, Kp // TK),
            in_specs=[
                pl.BlockSpec((TM, TK), lambda i, j, k: (i, k)),
                pl.BlockSpec((TK, TN), lambda i, j, k: (k, j)),
                pl.BlockSpec((1, TN), lambda i, j, k: (0, j)),
            ],
            out_specs=pl.BlockSpec((TM, TN), lambda i, j, k: (i, j)),
            scratch_shapes=[pltpu.VMEM((TM, TN), jnp.float32)],
        ),
        compiler_params=cparams(("parallel", "parallel", "arbitrary")),
        cost_estimate=cost,
    )(a_p, b_p, bias_p)


# ---------------------------------------------------------------------------
# Parameter preparation (done once, outside the forward)
# ---------------------------------------------------------------------------

def prepare_basic_conv2d(w, gamma, beta, running_mean, running_var, eps=1e-3):
    """Fold eval-mode BN into the conv weights; pad & bf16-cast once.

    w: (Cout, Cin, kh, kw) PyTorch OIHW layout.
    Returns (wmat_p bf16 (Kp, Np), bias_p f32 (1, Np), meta dict).
    """
    Cout, Cin, kh, kw = w.shape
    scale = gamma / jnp.sqrt(running_var + eps)           # BN scale
    bias = beta - running_mean * scale                    # BN bias
    # K ordering must match im2col: (kh, kw, Cin).
    wmat = jnp.transpose(w, (2, 3, 1, 0)).reshape(kh * kw * Cin, Cout)
    wmat = wmat * scale[None, :]                          # fold BN scale into weights
    K, N = wmat.shape
    Kp, Np = _rup(K, LANE), _rup(N, LANE)
    wmat_p = jnp.pad(wmat, ((0, Kp - K), (0, Np - N))).astype(jnp.bfloat16)
    bias_p = jnp.pad(bias.reshape(1, N), ((0, 0), (0, Np - N))).astype(jnp.float32)
    meta = dict(cout=int(Cout), kh=int(kh), kw=int(kw))
    return wmat_p, bias_p, meta


# ---------------------------------------------------------------------------
# Forward: BasicConv2d = Conv2d(bias=False) + BN(eval) + ReLU
# ---------------------------------------------------------------------------

def _im2col_nhwc_bf16(x_nchw, kh, kw, stride, padding):
    """Builds the (M, K) = (B*Ho*Wo, kh*kw*Cin) patch matrix directly in bf16."""
    B, Cin, H, W = x_nchw.shape
    sh, sw = stride
    ph, pw = padding
    Ho = (H + 2 * ph - kh) // sh + 1
    Wo = (W + 2 * pw - kw) // sw + 1
    x = jnp.transpose(x_nchw, (0, 2, 3, 1)).astype(jnp.bfloat16)  # NHWC, bf16 once
    xp = jnp.pad(x, ((0, 0), (ph, ph), (pw, pw), (0, 0)))
    cols = []
    for i in range(kh):
        for j in range(kw):
            cols.append(xp[:, i:i + (Ho - 1) * sh + 1:sh,
                           j:j + (Wo - 1) * sw + 1:sw, :])
    patches = jnp.stack(cols, axis=3)                     # (B,Ho,Wo,kh*kw,Cin) bf16
    patches = patches.reshape(B * Ho * Wo, kh * kw * Cin)
    return patches, Ho, Wo


def basic_conv2d_forward(x, wmat_p, bias_p, *, cout, kh, kw,
                         stride=(1, 1), padding=(0, 0)):
    """x: (B, Cin, H, W) NCHW (matches PyTorch).  Returns NCHW f32 output."""
    B = x.shape[0]
    patches, Ho, Wo = _im2col_nhwc_bf16(x, kh, kw, stride, padding)  # (M, K) bf16
    M, K = patches.shape
    Kp, Np = wmat_p.shape

    # Tile sizes: 256-row tiles on v6e/v7x, 128 on v5e; multiple of 16 (bf16
    # sublane packing) for small-M layers.  Output N stays lane-dense (x128).
    if M >= 256 and not _is_v5e():
        TM = 256
    elif M >= 128:
        TM = 128
    else:
        TM = _rup(M, 16)
    Mp = _rup(M, TM)

    a_p = patches
    if Mp != M or Kp != K:
        a_p = jnp.pad(a_p, ((0, Mp - M), (0, Kp - K)))               # bf16 pad once

    out = _matmul_bias_relu(a_p, wmat_p, bias_p, TM)                 # (Mp, Np) bf16
    out = out[:M, :cout].reshape(B, Ho, Wo, cout)
    # TODO(synk): if the consumer accepts channels-last bf16, return `out` here
    # directly and skip the NHWC->NCHW relayout + f32 upcast.
    return jnp.transpose(out, (0, 3, 1, 2)).astype(jnp.float32)      # NCHW f32


# ---------------------------------------------------------------------------
# Reference (pure JAX) for validation
# ---------------------------------------------------------------------------

def reference_basic_conv2d(x, w, gamma, beta, running_mean, running_var,
                           eps, stride, padding):
    scale = gamma / jnp.sqrt(running_var + eps)
    bias = beta - running_mean * scale
    w_folded = w * scale[:, None, None, None]
    # Match the kernel's bf16 operand rounding (f32 accumulation).
    w_bf = w_folded.astype(jnp.bfloat16).astype(jnp.float32)
    x_bf = x.astype(jnp.bfloat16).astype(jnp.float32)
    y = jax.lax.conv_general_dilated(
        x_bf, w_bf, window_strides=stride,
        padding=[(padding[0], padding[0]), (padding[1], padding[1])],
        dimension_numbers=("NCHW", "OIHW", "NCHW"),
        precision=jax.lax.Precision.HIGHEST)
    y = y + bias[None, :, None, None]
    return jnp.maximum(y, 0.0)


# ---------------------------------------------------------------------------

if __name__ == "__main__":
    key = jax.random.PRNGKey(0)
    kx, kw_, kg, kb, km, kv = jax.random.split(key, 6)

    # Small shapes consistent with BasicConv2d usage (NCHW, 3x3, pad 1).
    B, Cin, H, W = 2, 4, 16, 16
    Cout, kh, kw = 32, 3, 3
    stride, padding, eps = (1, 1), (1, 1), 0.001

    x = jax.random.normal(kx, (B, Cin, H, W), jnp.float32)
    w = jax.random.normal(kw_, (Cout, Cin, kh, kw), jnp.float32) * 0.1
    gamma = jax.random.uniform(kg, (Cout,), jnp.float32, 0.5, 1.5)
    beta = jax.random.normal(kb, (Cout,), jnp.float32) * 0.1
    running_mean = jax.random.normal(km, (Cout,), jnp.float32) * 0.1
    running_var = jax.random.uniform(kv, (Cout,), jnp.float32, 0.5, 1.5)

    # Fold BN + reshape/pad/bf16-cast the weights once (outside the forward).
    wmat_p, bias_p, meta = prepare_basic_conv2d(
        w, gamma, beta, running_mean, running_var, eps=eps)

    fwd = jax.jit(functools.partial(
        basic_conv2d_forward, cout=meta["cout"], kh=meta["kh"], kw=meta["kw"],
        stride=stride, padding=padding))

    out = fwd(x, wmat_p, bias_p)
    out = jax.block_until_ready(out)

    ref = reference_basic_conv2d(x, w, gamma, beta, running_mean, running_var,
                                 eps, stride, padding)
    ref = jax.block_until_ready(ref)

    assert out.shape == (B, Cout, H, W), out.shape
    assert bool(jnp.all(jnp.isfinite(out)))
    np.testing.assert_allclose(np.asarray(out), np.asarray(ref),
                               rtol=2e-2, atol=2e-2)
    print("KERNEL_OK")
</pallas_src>

<mosaic_0001>
module attributes {stable_mosaic.version = 11 : i64} {
  func.func @_mm_kernel_single(%arg0: i32, %arg1: memref<256x128xbf16, #tpu.memory_space<vmem>>, %arg2: memref<128x128xbf16, #tpu.memory_space<vmem>>, %arg3: memref<1x128xf32, #tpu.memory_space<vmem>>, %arg4: memref<256x128xbf16, #tpu.memory_space<vmem>>) attributes {dimension_semantics = [#tpu.dimension_semantics<parallel>], iteration_bounds = array<i64: 2>, scalar_prefetch = 0 : i64, scratch_operands = 0 : i64, tpu.core_type = #tpu.core_type<tc>, window_params = [{transform_indices = @transform_0, window_bounds = array<i64: 256, 128>}, {pipeline_mode = #tpu.pipeline_mode<synchronous>, transform_indices = @transform_1, window_bounds = array<i64: 128, 128>}, {pipeline_mode = #tpu.pipeline_mode<synchronous>, transform_indices = @transform_2, window_bounds = array<i64: 1, 128>}, {transform_indices = @transform_3, window_bounds = array<i64: 256, 128>}]} {
    %c0 = arith.constant 0 : index
    %c0_0 = arith.constant 0 : index
    %0 = vector.load %arg1[%c0, %c0_0] : memref<256x128xbf16, #tpu.memory_space<vmem>>, vector<256x128xbf16>
    %c0_1 = arith.constant 0 : index
    %c0_2 = arith.constant 0 : index
    %1 = vector.load %arg2[%c0_1, %c0_2] : memref<128x128xbf16, #tpu.memory_space<vmem>>, vector<128x128xbf16>
    %cst = arith.constant dense<0.000000e+00> : vector<256x128xf32>
    %2 = tpu.matmul %0, %1, %cst {dimension_numbers = #tpu.dot_dimension_numbers<[1], [0], [0], [1], [0, 0, 1, 1], [], []>} : vector<256x128xbf16>, vector<128x128xbf16>, vector<256x128xf32> -> vector<256x128xf32>
    %c0_3 = arith.constant 0 : index
    %c0_4 = arith.constant 0 : index
    %3 = vector.load %arg3[%c0_3, %c0_4] : memref<1x128xf32, #tpu.memory_space<vmem>>, vector<1x128xf32>
    %4 = vector.broadcast %3 : vector<1x128xf32> to vector<256x128xf32>
    %5 = arith.addf %2, %4 : vector<256x128xf32>
    %cst_5 = arith.constant 0.000000e+00 : f32
    %6 = vector.broadcast %cst_5 : f32 to vector<256x128xf32>
    %7 = arith.maximumf %5, %6 : vector<256x128xf32>
    %8 = arith.truncf %7 : vector<256x128xf32> to vector<256x128xbf16>
    %c0_6 = arith.constant 0 : index
    %c0_7 = arith.constant 0 : index
    %9 = vector.load %arg4[%c0_6, %c0_7] : memref<256x128xbf16, #tpu.memory_space<vmem>>, vector<256x128xbf16>
    tpu.vector_store %arg4[%c0_6, %c0_7], %8 {strides = array<i32>} : memref<256x128xbf16, #tpu.memory_space<vmem>>, vector<256x128xbf16>,
    return
  }
  func.func @transform_0(%arg0: i32) -> (i32, i32) {
    %c0_i32 = arith.constant 0 : i32
    %c0_i32_0 = arith.constant 0 : i32
    return %arg0, %c0_i32 : i32, i32
  }
  func.func @transform_1(%arg0: i32) -> (i32, i32) {
    %c0_i32 = arith.constant 0 : i32
    %c0_i32_0 = arith.constant 0 : i32
    %c0_i32_1 = arith.constant 0 : i32
    return %c0_i32, %c0_i32_0 : i32, i32
  }
  func.func @transform_2(%arg0: i32) -> (i32, i32) {
    %c0_i32 = arith.constant 0 : i32
    %c0_i32_0 = arith.constant 0 : i32
    %c0_i32_1 = arith.constant 0 : i32
    return %c0_i32, %c0_i32_0 : i32, i32
  }
  func.func @transform_3(%arg0: i32) -> (i32, i32) {
    %c0_i32 = arith.constant 0 : i32
    %c0_i32_0 = arith.constant 0 : i32
    return %arg0, %c0_i32 : i32, i32
  }
}

</mosaic_0001>

<llo_original>
// kernel: basic_conv2d_forward.1
$region0: #{basic_conv2d_forward.1}
  #allocation0 [shape = 'u32[]', space=smem, size = 0x4, offset = 0x4, fixed_abs, tag = 'smem constant byte address 0x4 - core index']
  #allocation1 [shape = 'u32[144,128]{1,0:T(1,128)}', space=vmem, size = 0x12000, scoped, tag = 'internal scratch']
  %s0 = inlined_call_operand.vmem [shape: bf16[512,128], index: 0, kind: input, shape index: {}]
  %s1 = inlined_call_operand.vmem [shape: bf16[128,128], index: 1, kind: input, shape index: {}]
  %s2 = inlined_call_operand.vmem [shape: f32[1,128], index: 2, kind: input, shape index: {}]
  %s3 = inlined_call_operand.vmem [shape: bf16[512,128], index: 3, kind: output, shape index: {}]
  %s4 = sld [smem:[#allocation0]]
  $region45: #{basic_conv2d_forward.1} parent=0
    _
  %s6 = ssub.s32 1, %s4
  %s7 = scalar_select 0, %s6, %s4
  loop: start=0, step=1, limit=4
  $region2: #{basic_conv2d_forward.1} parent=0 // loop_pre_header
    _
  $region3: #{basic_conv2d_forward.1} parent=0 // loop_header
    %s9 = sphi 0, %s13
    %p10 = scmp.ge.s32.totalorder %s9, 4
    %s19 = sphi 0, %s21
    %s22 = sphi 0, %s19
    %s23 = sphi 0, %s22
    %s39 = sphi 0, %s23
    %s43 = sphi 0, %s43
    %s45 = sphi 0, %s43
    %s46 = sphi 0, %s45
    %s60 = sphi 0, %s46
    %s64 = sphi 0, %s64
    %s66 = sphi 0, %s64
    %s67 = sphi 0, %s66
    %s81 = sphi 0, %s67
    %s87 = sphi 0, %s89
    %s90 = sphi 0, %s87
    %s91 = sphi 0, %s90
    %s107 = sphi 0, %s91
  $region4: #{basic_conv2d_forward.1} parent=0 // loop_header_branch
    %12 = sbr.rel (%p10) target = $region8
  $region5: #{basic_conv2d_forward.1} parent=0 // loop_body
    %s14 = ssub.s32 %s9, 1
    %s15 = ssub.s32 %s9, 2
    %s16 = sadd.s32 %s9, 1
    %s17 = ssub.s32 %s9, %s16
    %p18 = scmp.eq.s32.totalorder %s17, 0
    %s20 = sadd.s32 %s19, 1
    %s21 = scalar_select %p18, %s19, %s20
    %p24 = pneg %p18
    %p25 = scmp.eq.s32.totalorder %s9, 1
    %p26 = por %p24, %p25
    %p27 = scmp.ne.s32.totalorder %s19, %s22
    %p28 = scmp.eq.s32.totalorder %s9, 0
    %p29 = por %p27, %p28
    %p30 = scmp.ne.s32.totalorder %s19, %s22
    %p31 = scmp.eq.s32.totalorder %s14, 1
    %p32 = por %p30, %p31
    %p33 = scmp.ne.s32.totalorder %s22, %s23
    %p34 = scmp.eq.s32.totalorder %s14, 0
    %p35 = por %p33, %p34
    %p36 = scmp.ne.s32.totalorder %s22, %s23
    %p37 = scmp.eq.s32.totalorder %s15, 1
    %p38 = por %p36, %p37
    %p40 = scmp.ne.s32.totalorder %s23, %s39
    %p41 = scmp.eq.s32.totalorder %s15, 0
    %p42 = por %p40, %p41
    %s44 = sadd.s32 %s43, 1
    %p47 = scmp.eq.s32.totalorder %s9, 1
    %p48 = scmp.ne.s32.totalorder %s43, %s45
    %p49 = scmp.eq.s32.totalorder %s9, 0
    %p50 = por %p48, %p49
    %p51 = scmp.ne.s32.totalorder %s43, %s45
    %p52 = scmp.eq.s32.totalorder %s14, 1
    %p53 = por %p51, %p52
    %p54 = scmp.ne.s32.totalorder %s45, %s46
    %p55 = scmp.eq.s32.totalorder %s14, 0
    %p56 = por %p54, %p55
    %p57 = scmp.ne.s32.totalorder %s45, %s46
    %p58 = scmp.eq.s32.totalorder %s15, 1
    %p59 = por %p57, %p58
    %p61 = scmp.ne.s32.totalorder %s46, %s60
    %p62 = scmp.eq.s32.totalorder %s15, 0
    %p63 = por %p61, %p62
    %s65 = sadd.s32 %s64, 1
    %p68 = scmp.eq.s32.totalorder %s9, 1
    %p69 = scmp.ne.s32.totalorder %s64, %s66
    %p70 = scmp.eq.s32.totalorder %s9, 0
    %p71 = por %p69, %p70
    %p72 = scmp.ne.s32.totalorder %s64, %s66
    %p73 = scmp.eq.s32.totalorder %s14, 1
    %p74 = por %p72, %p73
    %p75 = scmp.ne.s32.totalorder %s66, %s67
    %p76 = scmp.eq.s32.totalorder %s14, 0
    %p77 = por %p75, %p76
    %p78 = scmp.ne.s32.totalorder %s66, %s67
    %p79 = scmp.eq.s32.totalorder %s15, 1
    %p80 = por %p78, %p79
    %p82 = scmp.ne.s32.totalorder %s67, %s81
    %p83 = scmp.eq.s32.totalorder %s15, 0
    %p84 = por %p82, %p83
    %s85 = ssub.s32 %s9, %s16
    %p86 = scmp.eq.s32.totalorder %s85, 0
    %s88 = sadd.s32 %s87, 1
    %s89 = scalar_select %p86, %s87, %s88
    %p92 = pneg %p86
    %p93 = scmp.eq.s32.totalorder %s9, 1
    %p94 = por %p92, %p93
    %p95 = scmp.ne.s32.totalorder %s87, %s90
    %p96 = scmp.eq.s32.totalorder %s9, 0
    %p97 = por %p95, %p96
    %p98 = scmp.ne.s32.totalorder %s87, %s90
    %p99 = scmp.eq.s32.totalorder %s14, 1
    %p100 = por %p98, %p99
    %p101 = scmp.ne.s32.totalorder %s90, %s91
    %p102 = scmp.eq.s32.totalorder %s14, 0
    %p103 = por %p101, %p102
    %p104 = scmp.ne.s32.totalorder %s90, %s91
    %p105 = scmp.eq.s32.totalorder %s15, 1
    %p106 = por %p104, %p105
    %p108 = scmp.ne.s32.totalorder %s91, %s107
    %p109 = scmp.eq.s32.totalorder %s15, 0
    %p110 = por %p108, %p109
    %p111 = scmp.le.s32.totalorder 1, %s9
    %p112 = scmp.lt.s32.totalorder %s9, 3
    %p113 = pnand %p111, %p112
    %p114 = pneg %p113
    // Predicated region
    $region9: #{basic_conv2d_forward.1} parent=5 // pred_check
      _
    $region10: #{basic_conv2d_forward.1} parent=5 // pred_check_branch
      %116 = sbr.rel (%p113) target = $region12
    $region11: #{basic_conv2d_forward.1} parent=5 // pred_region
      %s117 = ssub.s32 %s9, 1
      // Predicated region
      $region13: #{basic_conv2d_forward.1} parent=11 // pred_check
        %p118 = pneg %p56
      $region14: #{basic_conv2d_forward.1} parent=11 // pred_check_branch
        %120 = sbr.rel (%p118) target = $region16
      $region15: #{basic_conv2d_forward.1} parent=11 // pred_region
        _
      $region16: #{basic_conv2d_forward.1} parent=11 // pred_fallthru
        _
      // Predicated region
      $region17: #{basic_conv2d_forward.1} parent=11 // pred_check
        %p121 = pneg %p77
      $region18: #{basic_conv2d_forward.1} parent=11 // pred_check_branch
        %123 = sbr.rel (%p121) target = $region20
      $region19: #{basic_conv2d_forward.1} parent=11 // pred_region
        _
      $region20: #{basic_conv2d_forward.1} parent=11 // pred_fallthru
        _
    $region12: #{basic_conv2d_forward.1} parent=5 // pred_fallthru
      _
    %p124 = scmp.lt.s32.totalorder %s9, 2
    // Predicated region
    $region21: #{basic_conv2d_forward.1} parent=5 // pred_check
      %p125 = pneg %p124
    $region22: #{basic_conv2d_forward.1} parent=5 // pred_check_branch
      %127 = sbr.rel (%p125) target = $region24
    $region23: #{basic_conv2d_forward.1} parent=5 // pred_region
      // Predicated region
      $region25: #{basic_conv2d_forward.1} parent=23 // pred_check
        %p128 = pneg %p29
      $region26: #{basic_conv2d_forward.1} parent=23 // pred_check_branch
        %130 = sbr.rel (%p128) target = $region28
      $region27: #{basic_conv2d_forward.1} parent=23 // pred_region
        %s131 = smul.u32 32, %s9
        %p132 = scmp.lt.s32.totalorder %s131, 63
        %s133 = scalar_select %p132, %s131, 63
        %s134 = smul.addr %s133, 4
        %s135 = scalar_lea.vmem %s0, %s134
        %s136 = smul.u32 32, %s9
      $region28: #{basic_conv2d_forward.1} parent=23 // pred_fallthru
        _
    $region24: #{basic_conv2d_forward.1} parent=5 // pred_fallthru
      _
    %p137 = scmp.le.s32.totalorder 1, %s9
    %p138 = scmp.lt.s32.totalorder %s9, 3
    %p139 = pnand %p137, %p138
    %p140 = pneg %p139
    // Predicated region
    $region29: #{basic_conv2d_forward.1} parent=5 // pred_check
      _
    $region30: #{basic_conv2d_forward.1} parent=5 // pred_check_branch
      %142 = sbr.rel (%p139) target = $region32
    $region31: #{basic_conv2d_forward.1} parent=5 // pred_region
      %s143 = ssub.s32 %s9, 1
      %s144 = smul.u32 32, %s14
      %p145 = scmp.lt.s32.totalorder %s144, 63
      %s146 = scalar_select %p145, %s144, 63
      %s147 = smul.addr %s146, 4
      %s148 = scalar_lea.vmem %s0, %s147
      %p149 = pneg %p35
      %p150 = pneg %p32
      %p151 = pneg %p56
      %p152 = pneg %p53
      %p153 = pneg %p77
      %p154 = pneg %p74
      %p155 = pneg %p103
      %p156 = pneg %p100
      %s157 = smul.u32 32, %s14
      %p158 = scmp.lt.s32.totalorder %s157, 63
      %s159 = scalar_select %p158, %s157, 63
      %s160 = smul.addr %s159, 4
      %s161 = scalar_lea.vmem %s3, %s160
      %s162 = smul.u32 32, %s14
      %p163 = scmp.lt.s32.totalorder %s162, 63
      %s164 = scalar_select %p163, %s162, 63
      %s165 = smul.addr %s164, 4
      %s166 = scalar_lea.vmem %s0, %s165
      %s167 = smul.u32 32, %s14
      %s168 = smul.u32 32, %s14
      %p169 = scmp.lt.s32.totalorder %s168, 63
      %s170 = scalar_select %p169, %s168, 63
      %s171 = smul.addr %s170, 4
      %s172 = scalar_lea.vmem %s3, %s171
      %s173 = smul.u32 32, %s14
      %v175 = vld [vmem:[%s166] sm:$0xf]
      %v176 = vld [vmem:[%s166 + $0x4] sm:$0xf]
      %v177 = vld [vmem:[%s166 + $0x8] sm:$0xf]
      %v178 = vld [vmem:[%s166 + $0xc] sm:$0xf]
      %v179 = vld [vmem:[%s166 + $0x10] sm:$0xf]
      %v180 = vld [vmem:[%s166 + $0x14] sm:$0xf]
      %v181 = vld [vmem:[%s166 + $0x18] sm:$0xf]
      %v182 = vld [vmem:[%s166 + $0x1c] sm:$0xf]
      %v183 = vld [vmem:[%s166 + $0x20] sm:$0xf]
      %v184 = vld [vmem:[%s166 + $0x24] sm:$0xf]
      %v185 = vld [vmem:[%s166 + $0x28] sm:$0xf]
      %v186 = vld [vmem:[%s166 + $0x2c] sm:$0xf]
      %v187 = vld [vmem:[%s166 + $0x30] sm:$0xf]
      %v188 = vld [vmem:[%s166 + $0x34] sm:$0xf]
      %v189 = vld [vmem:[%s166 + $0x38] sm:$0xf]
      %v190 = vld [vmem:[%s166 + $0x3c] sm:$0xf]
      %v191 = vld [vmem:[%s166 + $0x40] sm:$0xf]
      %v192 = vld [vmem:[%s166 + $0x44] sm:$0xf]
      %v193 = vld [vmem:[%s166 + $0x48] sm:$0xf]
      %v194 = vld [vmem:[%s166 + $0x4c] sm:$0xf]
      %v195 = vld [vmem:[%s166 + $0x50] sm:$0xf]
      %v196 = vld [vmem:[%s166 + $0x54] sm:$0xf]
      %v197 = vld [vmem:[%s166 + $0x58] sm:$0xf]
      %v198 = vld [vmem:[%s166 + $0x5c] sm:$0xf]
      %v199 = vld [vmem:[%s166 + $0x60] sm:$0xf]
      %v200 = vld [vmem:[%s166 + $0x64] sm:$0xf]
      %v201 = vld [vmem:[%s166 + $0x68] sm:$0xf]
      %v202 = vld [vmem:[%s166 + $0x6c] sm:$0xf]
      %v203 = vld [vmem:[%s166 + $0x70] sm:$0xf]
      %v204 = vld [vmem:[%s166 + $0x74] sm:$0xf]
      %v205 = vld [vmem:[%s166 + $0x78] sm:$0xf]
      %v206 = vld [vmem:[%s166 + $0x7c] sm:$0xf]
      %v207 = vld [vmem:[%s1] sm:$0xf]
      %v208 = vld [vmem:[%s1 + $0x4] sm:$0xf]
      %v209 = vld [vmem:[%s1 + $0x8] sm:$0xf]
      %v210 = vld [vmem:[%s1 + $0xc] sm:$0xf]
      %v211 = vld [vmem:[%s1 + $0x10] sm:$0xf]
      %v212 = vld [vmem:[%s1 + $0x14] sm:$0xf]
      %v213 = vld [vmem:[%s1 + $0x18] sm:$0xf]
      %v214 = vld [vmem:[%s1 + $0x1c] sm:$0xf]
      %v215 = vld [vmem:[%s1 + $0x20] sm:$0xf]
      %v216 = vld [vmem:[%s1 + $0x24] sm:$0xf]
      %v217 = vld [vmem:[%s1 + $0x28] sm:$0xf]
      %v218 = vld [vmem:[%s1 + $0x2c] sm:$0xf]
      %v219 = vld [vmem:[%s1 + $0x30] sm:$0xf]
      %v220 = vld [vmem:[%s1 + $0x34] sm:$0xf]
      %v221 = vld [vmem:[%s1 + $0x38] sm:$0xf]
      %v222 = vld [vmem:[%s1 + $0x3c] sm:$0xf]
      %v223 = vld [vmem:[%s2] sm:$0x1]
      %v225 = vlaneseq
      %v226 = vshrl.u32 %v225, 7
      %v227 = vsub.s32 0, %v226
      %v228 = vrot.slane %v223, %v227
      %v262 = vunpack.c.l.b16 %v175
      %v263 = vunpack.c.l.b16 %v176
      %v264 = vunpack.c.l.b16 %v177
      %v265 = vunpack.c.l.b16 %v178
      %v266 = vunpack.c.l.b16 %v179
      %v267 = vunpack.c.l.b16 %v180
      %v268 = vunpack.c.l.b16 %v181
      %v269 = vunpack.c.l.b16 %v182
      %v270 = vunpack.c.l.b16 %v183
      %v271 = vunpack.c.l.b16 %v184
      %v272 = vunpack.c.l.b16 %v185
      %v273 = vunpack.c.l.b16 %v186
      %v274 = vunpack.c.l.b16 %v187
      %v275 = vunpack.c.l.b16 %v188
      %v276 = vunpack.c.l.b16 %v189
      %v277 = vunpack.c.l.b16 %v190
      %v278 = vunpack.c.l.b16 %v191
      %v279 = vunpack.c.l.b16 %v192
      %v280 = vunpack.c.l.b16 %v193
      %v281 = vunpack.c.l.b16 %v194
      %v282 = vunpack.c.l.b16 %v195
      %v283 = vunpack.c.l.b16 %v196
      %v284 = vunpack.c.l.b16 %v197
      %v285 = vunpack.c.l.b16 %v198
      %v286 = vunpack.c.l.b16 %v199
      %v287 = vunpack.c.l.b16 %v200
      %v288 = vunpack.c.l.b16 %v201
      %v289 = vunpack.c.l.b16 %v202
      %v290 = vunpack.c.l.b16 %v203
      %v291 = vunpack.c.l.b16 %v204
      %v292 = vunpack.c.l.b16 %v205
      %v293 = vunpack.c.l.b16 %v206
      %v294 = vpack.c.b16 %v263, %v262
      %v295 = vpack.c.b16 %v265, %v264
      %v296 = vpack.c.b16 %v267, %v266
      %v297 = vpack.c.b16 %v269, %v268
      %v298 = vpack.c.b16 %v271, %v270
      %v299 = vpack.c.b16 %v273, %v272
      %v300 = vpack.c.b16 %v275, %v274
      %v301 = vpack.c.b16 %v277, %v276
      %v302 = vpack.c.b16 %v279, %v278
      %v303 = vpack.c.b16 %v281, %v280
      %v304 = vpack.c.b16 %v283, %v282
      %v305 = vpack.c.b16 %v285, %v284
      %v306 = vpack.c.b16 %v287, %v286
      %v307 = vpack.c.b16 %v289, %v288
      %v308 = vpack.c.b16 %v291, %v290
      %v309 = vpack.c.b16 %v293, %v292
      %v342 = vunpack.c.l.b16 %v207
      %v343 = vunpack.c.l.b16 %v208
      %v344 = vunpack.c.l.b16 %v209
      %v345 = vunpack.c.l.b16 %v210
      %v346 = vunpack.c.l.b16 %v211
      %v347 = vunpack.c.l.b16 %v212
      %v348 = vunpack.c.l.b16 %v213
      %v349 = vunpack.c.l.b16 %v214
      %v350 = vunpack.c.l.b16 %v215
      %v351 = vunpack.c.l.b16 %v216
      %v352 = vunpack.c.l.b16 %v217
      %v353 = vunpack.c.l.b16 %v218
      %v354 = vunpack.c.l.b16 %v219
      %v355 = vunpack.c.l.b16 %v220
      %v356 = vunpack.c.l.b16 %v221
      %v357 = vunpack.c.l.b16 %v222
      %v358 = vpack.c.b16 %v343, %v342
      %v359 = vpack.c.b16 %v345, %v344
      %v360 = vpack.c.b16 %v347, %v346
      %v361 = vpack.c.b16 %v349, %v348
      %v362 = vpack.c.b16 %v351, %v350
      %v363 = vpack.c.b16 %v353, %v352
      %v364 = vpack.c.b16 %v355, %v354
      %v365 = vpack.c.b16 %v357, %v356
      %374 = vmatprep.subr.bf16.mxu0 0
      %375 = vmatpush1.bf16.msra.mxu0 %v365
      %376 = vmatprep.subr.bf16.mxu0 0
      %377 = vmatpush1.bf16.msra.mxu0 %v364
      %378 = vmatprep.subr.bf16.mxu0 0
      %379 = vmatpush1.bf16.msra.mxu0 %v363
      %380 = vmatprep.subr.bf16.mxu0 0
      %381 = vmatpush1.bf16.msra.mxu0 %v362
      %382 = vmatprep.subr.bf16.mxu0 0
      %383 = vmatpush1.bf16.msra.mxu0 %v361
      %384 = vmatprep.subr.bf16.mxu0 0
      %385 = vmatpush1.bf16.msra.mxu0 %v360
      %386 = vmatprep.subr.bf16.mxu0 0
      %387 = vmatpush1.bf16.msra.mxu0 %v359
      %388 = vmatprep.subr.bf16.mxu0 0
      %389 = vmatpush1.bf16.msra.mxu0 %v358
      %390 = vmatprep.subr.bf16.mxu0 0
      %391 = vmatpush2.bf16.msra.mxu0 0
      %392 = vmatprep.subr.bf16.mxu0 0
      %393 = vmatpush2.bf16.msra.mxu0 0
      %394 = vmatprep.subr.bf16.mxu0 0
      %395 = vmatpush2.bf16.msra.mxu0 0
      %396 = vmatprep.subr.bf16.mxu0 0
      %397 = vmatpush2.bf16.msra.mxu0 0
      %398 = vmatprep.subr.bf16.mxu0 0
      %399 = vmatpush2.bf16.msra.mxu0 0
      %400 = vmatprep.subr.bf16.mxu0 0
      %401 = vmatpush2.bf16.msra.mxu0 0
      %402 = vmatprep.subr.bf16.mxu0 0
      %403 = vmatpush2.bf16.msra.mxu0 0
      %404 = vmatprep.subr.bf16.mxu0 0
      %405 = vmatpush2.bf16.msra.mxu0 0
      %406 = vmatprep.mubr.bf16.mxu0 0
      %407 = vmatmul.mubr.bf16.gmra.mxu0 %v294
      %v408 = vpop.f32.mrf.mxu0
      %v409 = vadd.f32 %v228, %v408
      %v410 = vpop.f32.mrf.mxu0
      %v411 = vpop.f32.mrf.mxu0
      %v412 = vadd.f32 %v228, %v411
      %v413 = vpop.f32.mrf.mxu0
      %414 = vmatprep.mubr.bf16.mxu0 0
      %415 = vmatmul.mubr.bf16.gmra.mxu0 %v295
      %v416 = vpop.f32.mrf.mxu0
      %v417 = vadd.f32 %v228, %v416
      %v418 = vpop.f32.mrf.mxu0
      %v419 = vpop.f32.mrf.mxu0
      %v420 = vadd.f32 %v228, %v419
      %v421 = vpop.f32.mrf.mxu0
      %422 = vmatprep.mubr.bf16.mxu0 0
      %423 = vmatmul.mubr.bf16.gmra.mxu0 %v296
      %v424 = vpop.f32.mrf.mxu0
      %v425 = vadd.f32 %v228, %v424
      %v426 = vpop.f32.mrf.mxu0
      %v427 = vpop.f32.mrf.mxu0
      %v428 = vadd.f32 %v228, %v427
      %v429 = vpop.f32.mrf.mxu0
      %430 = vmatprep.mubr.bf16.mxu0 0
      %431 = vmatmul.mubr.bf16.gmra.mxu0 %v297
      %v432 = vpop.f32.mrf.mxu0
      %v433 = vadd.f32 %v228, %v432
      %v434 = vpop.f32.mrf.mxu0
      %v435 = vpop.f32.mrf.mxu0
      %v436 = vadd.f32 %v228, %v435
      %v437 = vpop.f32.mrf.mxu0
      %438 = vmatprep.mubr.bf16.mxu0 0
      %439 = vmatmul.mubr.bf16.gmra.mxu0 %v298
      %v440 = vpop.f32.mrf.mxu0
      %v441 = vadd.f32 %v228, %v440
      %v442 = vpop.f32.mrf.mxu0
      %v443 = vpop.f32.mrf.mxu0
      %v444 = vadd.f32 %v228, %v443
      %v445 = vpop.f32.mrf.mxu0
      %446 = vmatprep.mubr.bf16.mxu0 0
      %447 = vmatmul.mubr.bf16.gmra.mxu0 %v299
      %v448 = vpop.f32.mrf.mxu0
      %v449 = vadd.f32 %v228, %v448
      %v450 = vpop.f32.mrf.mxu0
      %v451 = vpop.f32.mrf.mxu0
      %v452 = vadd.f32 %v228, %v451
      %v453 = vpop.f32.mrf.mxu0
      %454 = vmatprep.mubr.bf16.mxu0 0
      %455 = vmatmul.mubr.bf16.gmra.mxu0 %v300
      %v456 = vpop.f32.mrf.mxu0
      %v457 = vadd.f32 %v228, %v456
      %v458 = vpop.f32.mrf.mxu0
      %v459 = vpop.f32.mrf.mxu0
      %v460 = vadd.f32 %v228, %v459
      %v461 = vpop.f32.mrf.mxu0
      %462 = vmatprep.mubr.bf16.mxu0 0
      %463 = vmatmul.mubr.bf16.gmra.mxu0 %v301
      %v464 = vpop.f32.mrf.mxu0
      %v465 = vadd.f32 %v228, %v464
      %v466 = vpop.f32.mrf.mxu0
      %v467 = vpop.f32.mrf.mxu0
      %v468 = vadd.f32 %v228, %v467
      %v469 = vpop.f32.mrf.mxu0
      %470 = vmatprep.mubr.bf16.mxu0 0
      %471 = vmatmul.mubr.bf16.gmra.mxu0 %v302
      %v472 = vpop.f32.mrf.mxu0
      %v473 = vadd.f32 %v228, %v472
      %v474 = vpop.f32.mrf.mxu0
      %v475 = vpop.f32.mrf.mxu0
      %v476 = vadd.f32 %v228, %v475
      %v477 = vpop.f32.mrf.mxu0
      %478 = vmatprep.mubr.bf16.mxu0 0
      %479 = vmatmul.mubr.bf16.gmra.mxu0 %v303
      %v480 = vpop.f32.mrf.mxu0
      %v481 = vadd.f32 %v228, %v480
      %v482 = vpop.f32.mrf.mxu0
      %v483 = vpop.f32.mrf.mxu0
      %v484 = vadd.f32 %v228, %v483
      %v485 = vpop.f32.mrf.mxu0
      %486 = vmatprep.mubr.bf16.mxu0 0
      %487 = vmatmul.mubr.bf16.gmra.mxu0 %v304
      %v488 = vpop.f32.mrf.mxu0
      %v489 = vadd.f32 %v228, %v488
      %v490 = vpop.f32.mrf.mxu0
      %v491 = vpop.f32.mrf.mxu0
      %v492 = vadd.f32 %v228, %v491
      %v493 = vpop.f32.mrf.mxu0
      %494 = vmatprep.mubr.bf16.mxu0 0
      %495 = vmatmul.mubr.bf16.gmra.mxu0 %v305
      %v496 = vpop.f32.mrf.mxu0
      %v497 = vadd.f32 %v228, %v496
      %v498 = vpop.f32.mrf.mxu0
      %v499 = vpop.f32.mrf.mxu0
      %v500 = vadd.f32 %v228, %v499
      %v501 = vpop.f32.mrf.mxu0
      %502 = vmatprep.mubr.bf16.mxu0 0
      %503 = vmatmul.mubr.bf16.gmra.mxu0 %v306
      %v504 = vpop.f32.mrf.mxu0
      %v505 = vadd.f32 %v228, %v504
      %v506 = vpop.f32.mrf.mxu0
      %v507 = vpop.f32.mrf.mxu0
      %v508 = vadd.f32 %v228, %v507
      %v509 = vpop.f32.mrf.mxu0
      %510 = vmatprep.mubr.bf16.mxu0 0
      %511 = vmatmul.mubr.bf16.gmra.mxu0 %v307
      %v512 = vpop.f32.mrf.mxu0
      %v513 = vadd.f32 %v228, %v512
      %v514 = vpop.f32.mrf.mxu0
      %v515 = vpop.f32.mrf.mxu0
      %v516 = vadd.f32 %v228, %v515
      %v517 = vpop.f32.mrf.mxu0
      %518 = vmatprep.mubr.bf16.mxu0 0
      %519 = vmatmul.mubr.bf16.gmra.mxu0 %v308
      %v520 = vpop.f32.mrf.mxu0
      %v521 = vadd.f32 %v228, %v520
      %v522 = vpop.f32.mrf.mxu0
      %v523 = vpop.f32.mrf.mxu0
      %v524 = vadd.f32 %v228, %v523
      %v525 = vpop.f32.mrf.mxu0
      %526 = vmatprep.mubr.bf16.mxu0 0
      %527 = vmatmul.mubr.bf16.gmra.mxu0 %v309
      %v528 = vpop.f32.mrf.mxu0
      %v529 = vadd.f32 %v228, %v528
      %v530 = vpop.f32.mrf.mxu0
      %v531 = vpop.f32.mrf.mxu0
      %v532 = vadd.f32 %v228, %v531
      %v533 = vpop.f32.mrf.mxu0
      %534 = vdwg.mxu0
      %v535 = vmax.f32 %v409, 0.0
      %v536 = vmax.f32 %v412, 0.0
      %v537 = vmax.f32 %v417, 0.0
      %v538 = vmax.f32 %v420, 0.0
      %v539 = vmax.f32 %v425, 0.0
      %v540 = vmax.f32 %v428, 0.0
      %v541 = vmax.f32 %v433, 0.0
      %v542 = vmax.f32 %v436, 0.0
      %v543 = vmax.f32 %v441, 0.0
      %v544 = vmax.f32 %v444, 0.0
      %v545 = vmax.f32 %v449, 0.0
      %v546 = vmax.f32 %v452, 0.0
      %v547 = vmax.f32 %v457, 0.0
      %v548 = vmax.f32 %v460, 0.0
      %v549 = vmax.f32 %v465, 0.0
      %v550 = vmax.f32 %v468, 0.0
      %v551 = vmax.f32 %v473, 0.0
      %v552 = vmax.f32 %v476, 0.0
      %v553 = vmax.f32 %v481, 0.0
      %v554 = vmax.f32 %v484, 0.0
      %v555 = vmax.f32 %v489, 0.0
      %v556 = vmax.f32 %v492, 0.0
      %v557 = vmax.f32 %v497, 0.0
      %v558 = vmax.f32 %v500, 0.0
      %v559 = vmax.f32 %v505, 0.0
      %v560 = vmax.f32 %v508, 0.0
      %v561 = vmax.f32 %v513, 0.0
      %v562 = vmax.f32 %v516, 0.0
      %v563 = vmax.f32 %v521, 0.0
      %v564 = vmax.f32 %v524, 0.0
      %v565 = vmax.f32 %v529, 0.0
      %v566 = vmax.f32 %v532, 0.0
      %v567 = vpack.c.bf16 %v536, %v535
      %v568 = vpack.c.bf16 %v538, %v537
      %v569 = vpack.c.bf16 %v540, %v539
      %v570 = vpack.c.bf16 %v542, %v541
      %v571 = vpack.c.bf16 %v544, %v543
      %v572 = vpack.c.bf16 %v546, %v545
      %v573 = vpack.c.bf16 %v548, %v547
      %v574 = vpack.c.bf16 %v550, %v549
      %v575 = vpack.c.bf16 %v552, %v551
      %v576 = vpack.c.bf16 %v554, %v553
      %v577 = vpack.c.bf16 %v556, %v555
      %v578 = vpack.c.bf16 %v558, %v557
      %v579 = vpack.c.bf16 %v560, %v559
      %v580 = vpack.c.bf16 %v562, %v561
      %v581 = vpack.c.bf16 %v564, %v563
      %v582 = vpack.c.bf16 %v566, %v565
      %v599 = vunpack.c.l.b16 %v567
      %v600 = vunpack.c.h.b16 %v567
      %v601 = vunpack.c.l.b16 %v568
      %v602 = vunpack.c.h.b16 %v568
      %v603 = vunpack.c.l.b16 %v569
      %v604 = vunpack.c.h.b16 %v569
      %v605 = vunpack.c.l.b16 %v570
      %v606 = vunpack.c.h.b16 %v570
      %v607 = vunpack.c.l.b16 %v571
      %v608 = vunpack.c.h.b16 %v571
      %v609 = vunpack.c.l.b16 %v572
      %v610 = vunpack.c.h.b16 %v572
      %v611 = vunpack.c.l.b16 %v573
      %v612 = vunpack.c.h.b16 %v573
      %v613 = vunpack.c.l.b16 %v574
      %v614 = vunpack.c.h.b16 %v574
      %v615 = vunpack.c.l.b16 %v575
      %v616 = vunpack.c.h.b16 %v575
      %v617 = vunpack.c.l.b16 %v576
      %v618 = vunpack.c.h.b16 %v576
      %v619 = vunpack.c.l.b16 %v577
      %v620 = vunpack.c.h.b16 %v577
      %v621 = vunpack.c.l.b16 %v578
      %v622 = vunpack.c.h.b16 %v578
      %v623 = vunpack.c.l.b16 %v579
      %v624 = vunpack.c.h.b16 %v579
      %v625 = vunpack.c.l.b16 %v580
      %v626 = vunpack.c.h.b16 %v580
      %v627 = vunpack.c.l.b16 %v581
      %v628 = vunpack.c.h.b16 %v581
      %v629 = vunpack.c.l.b16 %v582
      %v630 = vunpack.c.h.b16 %v582
      %v631 = vpack.c.b16 %v599, %v599
      %v632 = vpack.c.b16 %v600, %v600
      %v633 = vpack.c.b16 %v601, %v601
      %v634 = vpack.c.b16 %v602, %v602
      %v635 = vpack.c.b16 %v603, %v603
      %v636 = vpack.c.b16 %v604, %v604
      %v637 = vpack.c.b16 %v605, %v605
      %v638 = vpack.c.b16 %v606, %v606
      %v639 = vpack.c.b16 %v607, %v607
      %v640 = vpack.c.b16 %v608, %v608
      %v641 = vpack.c.b16 %v609, %v609
      %v642 = vpack.c.b16 %v610, %v610
      %v643 = vpack.c.b16 %v611, %v611
      %v644 = vpack.c.b16 %v612, %v612
      %v645 = vpack.c.b16 %v613, %v613
      %v646 = vpack.c.b16 %v614, %v614
      %v647 = vpack.c.b16 %v615, %v615
      %v648 = vpack.c.b16 %v616, %v616
      %v649 = vpack.c.b16 %v617, %v617
      %v650 = vpack.c.b16 %v618, %v618
      %v651 = vpack.c.b16 %v619, %v619
      %v652 = vpack.c.b16 %v620, %v620
      %v653 = vpack.c.b16 %v621, %v621
      %v654 = vpack.c.b16 %v622, %v622
      %v655 = vpack.c.b16 %v623, %v623
      %v656 = vpack.c.b16 %v624, %v624
      %v657 = vpack.c.b16 %v625, %v625
      %v658 = vpack.c.b16 %v626, %v626
      %v659 = vpack.c.b16 %v627, %v627
      %v660 = vpack.c.b16 %v628, %v628
      %v661 = vpack.c.b16 %v629, %v629
      %v662 = vpack.c.b16 %v630, %v630
      %695 = vst [vmem:[%s172] sm:$0xf] %v631
      %696 = vst [vmem:[%s172 + $0x4] sm:$0xf] %v632
      %697 = vst [vmem:[%s172 + $0x8] sm:$0xf] %v633
      %698 = vst [vmem:[%s172 + $0xc] sm:$0xf] %v634
      %699 = vst [vmem:[%s172 + $0x10] sm:$0xf] %v635
      %700 = vst [vmem:[%s172 + $0x14] sm:$0xf] %v636
      %701 = vst [vmem:[%s172 + $0x18] sm:$0xf] %v637
      %702 = vst [vmem:[%s172 + $0x1c] sm:$0xf] %v638
      %703 = vst [vmem:[%s172 + $0x20] sm:$0xf] %v639
      %704 = vst [vmem:[%s172 + $0x24] sm:$0xf] %v640
      %705 = vst [vmem:[%s172 + $0x28] sm:$0xf] %v641
      %706 = vst [vmem:[%s172 + $0x2c] sm:$0xf] %v642
      %707 = vst [vmem:[%s172 + $0x30] sm:$0xf] %v643
      %708 = vst [vmem:[%s172 + $0x34] sm:$0xf] %v644
      %709 = vst [vmem:[%s172 + $0x38] sm:$0xf] %v645
      %710 = vst [vmem:[%s172 + $0x3c] sm:$0xf] %v646
      %711 = vst [vmem:[%s172 + $0x40] sm:$0xf] %v647
      %712 = vst [vmem:[%s172 + $0x44] sm:$0xf] %v648
      %713 = vst [vmem:[%s172 + $0x48] sm:$0xf] %v649
      %714 = vst [vmem:[%s172 + $0x4c] sm:$0xf] %v650
      %715 = vst [vmem:[%s172 + $0x50] sm:$0xf] %v651
      %716 = vst [vmem:[%s172 + $0x54] sm:$0xf] %v652
      %717 = vst [vmem:[%s172 + $0x58] sm:$0xf] %v653
      %718 = vst [vmem:[%s172 + $0x5c] sm:$0xf] %v654
      %719 = vst [vmem:[%s172 + $0x60] sm:$0xf] %v655
      %720 = vst [vmem:[%s172 + $0x64] sm:$0xf] %v656
      %721 = vst [vmem:[%s172 + $0x68] sm:$0xf] %v657
      %722 = vst [vmem:[%s172 + $0x6c] sm:$0xf] %v658
      %723 = vst [vmem:[%s172 + $0x70] sm:$0xf] %v659
      %724 = vst [vmem:[%s172 + $0x74] sm:$0xf] %v660
      %725 = vst [vmem:[%s172 + $0x78] sm:$0xf] %v661
      %726 = vst [vmem:[%s172 + $0x7c] sm:$0xf] %v662
      %s727 = smul.u32 32, %s14
      %p728 = scmp.lt.s32.totalorder %s727, 63
      %s729 = scalar_select %p728, %s727, 63
      %s730 = smul.addr %s729, 4
      %s731 = scalar_lea.vmem %s3, %s730
      // Predicated region
      $region33: #{basic_conv2d_forward.1} parent=31 // pred_check
        %p732 = pneg %p100
      $region34: #{basic_conv2d_forward.1} parent=31 // pred_check_branch
        %734 = sbr.rel (%p732) target = $region36
      $region35: #{basic_conv2d_forward.1} parent=31 // pred_region
        %s735 = smul.u32 32, %s14
      $region36: #{basic_conv2d_forward.1} parent=31 // pred_fallthru
        _
    $region32: #{basic_conv2d_forward.1} parent=5 // pred_fallthru
      _
    %p736 = scmp.le.s32.totalorder 2, %s9
    // Predicated region
    $region37: #{basic_conv2d_forward.1} parent=5 // pred_check
      %p737 = pneg %p736
    $region38: #{basic_conv2d_forward.1} parent=5 // pred_check_branch
      %739 = sbr.rel (%p737) target = $region40
    $region39: #{basic_conv2d_forward.1} parent=5 // pred_region
      %s740 = ssub.s32 %s9, 2
      // Predicated region
      $region41: #{basic_conv2d_forward.1} parent=39 // pred_check
        %p741 = pneg %p106
      $region42: #{basic_conv2d_forward.1} parent=39 // pred_check_branch
        %743 = sbr.rel (%p741) target = $region44
      $region43: #{basic_conv2d_forward.1} parent=39 // pred_region
        %s744 = smul.u32 32, %s15
        %p745 = scmp.lt.s32.totalorder %s744, 63
        %s746 = scalar_select %p745, %s744, 63
        %s747 = smul.addr %s746, 4
        %s748 = scalar_lea.vmem %s3, %s747
      $region44: #{basic_conv2d_forward.1} parent=39 // pred_fallthru
        _
    $region40: #{basic_conv2d_forward.1} parent=5 // pred_fallthru
      _
  $region6: #{basic_conv2d_forward.1} parent=0 // loop_footer
    %s13 = sadd.s32 1, %s9
  $region7: #{basic_conv2d_forward.1} parent=0 // loop_footer_branch
    %8 = sbr.rel target = $region3
  $region8: #{basic_conv2d_forward.1} parent=0 // loop_exit
    _

</llo_original>
